<compile_context>
chip_gen: v5e
topology: v5e:2x2
jax: 0.10.0
libtpu: 0.0.40
codegen_flags: <defaults>
</compile_context>

<pallas_src>
import functools

import jax
import jax.numpy as jnp
from jax.experimental import pallas as pl
from jax.experimental.pallas import tpu as pltpu

_HIDDEN = 256
_N_CLS = 10
_CLS_OUT = 16                      # class dim padded to 16 -> 64 B/row f32 logits output
_VMEM_BUDGET = 40 * 1024 * 1024    # conservative: fits v7x's 64 MiB VMEM with headroom
_VMEM_LIMIT_CAP = 48 * 1024 * 1024


def _round_up(x, m):
    return (x + m - 1) // m * m


def _choose_tile_b(B, F, x_itemsize):
    """Batch-tile size: multiple of 16, VMEM-bounded, >=2 grid steps when worthwhile."""
    b16 = _round_up(B, 16)
    # Resident weights (2 pipeline buffers, bf16) leave this much for the streamed tiles.
    w_bytes = 2 * 2 * (F * _HIDDEN + _HIDDEN * _CLS_OUT)
    per_row = 2 * (F * x_itemsize + 128 * 4)   # double-buffered x tile + lane-padded logits tile
    avail = _VMEM_BUDGET - w_bytes
    cap = max(16, (avail // per_row) // 16 * 16) if avail > 16 * per_row else 16

    if b16 <= 256:                              # tiny batch: minimal padding, single tile
        return min(b16, cap)
    if b16 <= 512:                              # exactly two tiles -> both v7x TensorCores busy
        return min(_round_up((b16 + 1) // 2, 16), cap)
    for cand in (1024, 512, 256, 128):          # largest tile with >=2 steps and <=~25% padding
        if cand > cap:
            continue
        b_pad = _round_up(b16, cand)
        if b_pad // cand >= 2 and (b_pad - B) * 4 <= b_pad:
            return cand
    return min(128, cap)


# ----------------------------------------------------------------------------
# Pallas kernel: forward hot path for one batch tile
#   h      = relu(x_tile @ w)            (Dropout == identity in eval mode)
#   logits = h @ w1_padded               -> (TILE_B, 16) f32
# argmax / CE / penalty are tiny (B, 10) reductions done in the JAX wrapper.
# ----------------------------------------------------------------------------
def _mlp_kernel(x_ref, w_ref, w1_ref, logits_ref, *, compute_dtype):
    # Cast x on the VPU (hidden under DMA/MXU) rather than in a separate XLA pass.
    x = x_ref[...].astype(compute_dtype)
    h = jnp.dot(x, w_ref[...], preferred_element_type=jnp.float32)
    h = jnp.maximum(h, 0.0)                                    # nn.ReLU
    logits_ref[...] = jnp.dot(h.astype(w1_ref.dtype), w1_ref[...],
                              preferred_element_type=jnp.float32)


@functools.partial(jax.jit, static_argnames=("tile_b", "compute_dtype"))
def _mlp_forward_pallas(x, w_c, w1_c, *, tile_b, compute_dtype):
    """x: (B, F); w_c: (F, 256); w1_c: (256, 16). Returns f32 logits of shape (B, 10)."""
    B, F = x.shape
    b_pad = _round_up(B, tile_b)
    if b_pad != B:
        x = jnp.pad(x, ((0, b_pad - B), (0, 0)))   # zero rows -> zero logits, sliced off below

    grid = (b_pad // tile_b,)
    x_item = jnp.dtype(x.dtype).itemsize
    w_item = jnp.dtype(w_c.dtype).itemsize
    vmem_est = (2 * w_item * (F * _HIDDEN + _HIDDEN * _CLS_OUT)   # weights (2 buffers)
                + 2 * tile_b * F * x_item                          # x tile (2 buffers)
                + 2 * tile_b * 128 * 4)                            # logits tile, lanes pad to 128
    cost = pl.CostEstimate(
        flops=2 * b_pad * F * _HIDDEN + 2 * b_pad * _HIDDEN * _CLS_OUT,
        transcendentals=0,
        bytes_accessed=(b_pad * F * x_item
                        + (F * _HIDDEN + _HIDDEN * _CLS_OUT) * w_item
                        + b_pad * _CLS_OUT * 4),
    )

    logits = pl.pallas_call(
        functools.partial(_mlp_kernel, compute_dtype=compute_dtype),
        out_shape=jax.ShapeDtypeStruct((b_pad, _CLS_OUT), jnp.float32),
        grid_spec=pltpu.PrefetchScalarGridSpec(
            num_scalar_prefetch=0,
            grid=grid,
            in_specs=[
                # x: one batch tile per grid step -> double-buffered / pipelined DMA
                pl.BlockSpec((tile_b, F), lambda i: (i, 0)),
                # weights: constant index_map -> VMEM-resident across all grid steps
                pl.BlockSpec((F, _HIDDEN), lambda i: (0, 0)),
                pl.BlockSpec((_HIDDEN, _CLS_OUT), lambda i: (0, 0)),
            ],
            out_specs=pl.BlockSpec((tile_b, _CLS_OUT), lambda i: (i, 0)),
        ),
        compiler_params=pltpu.CompilerParams(
            # batch axis is embarrassingly parallel -> shards across TCs on v7x megacore
            dimension_semantics=("parallel",),
            vmem_limit_bytes=int(min(_VMEM_LIMIT_CAP,
                                     max(2 * vmem_est, 16 * 1024 * 1024))),
        ),
        cost_estimate=cost,
    )(x, w_c, w1_c)

    return logits[:B, :_N_CLS]


# ----------------------------------------------------------------------------
# XLA epilogue: argmax / CE / IRM penalty on the compact (B, 10) logits
# ----------------------------------------------------------------------------
@jax.jit
def _predict(logits):
    # torch.argmax(logits, 1): first-max index (int32 here; torch returns int64).
    return jnp.argmax(logits, axis=1).astype(jnp.int32)


@jax.jit
def _metrics(logits, y, w, w1, l1):
    y = y.astype(jnp.int32)
    pred = jnp.argmax(logits, axis=1).astype(jnp.int32)
    lse = jax.nn.logsumexp(logits, axis=1)
    picked = jnp.take_along_axis(logits, y[:, None], axis=1)[:, 0]
    ce = jnp.mean(lse - picked)                                # nn.CrossEntropyLoss (mean)
    # IRM penalty: (d/dscale CE(scale*logits, y) at scale=1)^2, analytically:
    #   grad = mean_i( sum_j softmax(logits_i)_j * logits_ij - logits_i[y_i] )
    p = jax.nn.softmax(logits, axis=1)
    grad = jnp.mean(jnp.sum(p * logits, axis=1) - picked)
    loss = ce + l1 * (jnp.abs(w1).sum() + jnp.abs(w).sum()) + grad * grad
    acc = jnp.mean((pred == y).astype(jnp.float32))
    return loss, acc


# ----------------------------------------------------------------------------
# Model wrapper reproducing Model.forward semantics
# ----------------------------------------------------------------------------
class Model:
    def __init__(self, num_feature, drop_rate, l1, key, compute_dtype=jnp.bfloat16):
        kw, kw1 = jax.random.split(key)
        # Parameter(torch.randn(num_feature, 256) / num_feature)  (f32 master copies)
        self.w = (jax.random.normal(kw, (num_feature, _HIDDEN), jnp.float32)
                  / float(num_feature))
        # Parameter(torch.randn(256, 10) / 256)
        self.w1 = jax.random.normal(kw1, (_HIDDEN, _N_CLS), jnp.float32) / float(_HIDDEN)
        # Kernel copies: cast once here (not every forward); class dim zero-padded to 16.
        self.w_c = self.w.astype(compute_dtype)
        self.w1_c = jnp.pad(self.w1, ((0, 0), (0, _CLS_OUT - _N_CLS))).astype(compute_dtype)
        self.drop_rate = drop_rate   # eval mode -> Dropout is identity
        self.l1 = l1
        self.compute_dtype = compute_dtype

    def forward(self, x, y=None):
        tile_b = _choose_tile_b(x.shape[0], x.shape[1], jnp.dtype(x.dtype).itemsize)
        logits = _mlp_forward_pallas(x, self.w_c, self.w1_c,
                                     tile_b=tile_b, compute_dtype=self.compute_dtype)
        if y is None:
            return _predict(logits)
        return _metrics(logits, y, self.w, self.w1, self.l1)


if __name__ == "__main__":
    key = jax.random.PRNGKey(0)
    k_model, k_x, k_y = jax.random.split(key, 3)

    batch = 8
    num_feature = 32
    model = Model(num_feature=num_feature, drop_rate=0.5, l1=1e-3, key=k_model)

    x = jax.random.normal(k_x, (batch, num_feature), jnp.float32)
    y = jax.random.randint(k_y, (batch,), 0, _N_CLS, jnp.int32)

    # Inference path (y is None) -> pred
    pred = jax.block_until_ready(model.forward(x))
    assert pred.shape == (batch,)
    assert pred.dtype == jnp.int32
    assert bool(jnp.all((pred >= 0) & (pred < _N_CLS)))

    # Training-metrics path (y given) -> (loss, acc)
    loss, acc = model.forward(x, y)
    loss = jax.block_until_ready(loss)
    acc = jax.block_until_ready(acc)
    assert loss.shape == () and acc.shape == ()
    assert bool(jnp.isfinite(loss)) and 0.0 <= float(acc) <= 1.0

    print("KERNEL_OK")
</pallas_src>

<mosaic_0001>
module attributes {stable_mosaic.version = 11 : i64} {
  func.func @_mlp_kernel(%arg0: i32, %arg1: memref<16x32xf32, #tpu.memory_space<vmem>>, %arg2: memref<32x256xbf16, #tpu.memory_space<vmem>>, %arg3: memref<256x16xbf16, #tpu.memory_space<vmem>>, %arg4: memref<16x16xf32, #tpu.memory_space<vmem>>) attributes {dimension_semantics = [#tpu.dimension_semantics<parallel>], iteration_bounds = array<i64: 1>, scalar_prefetch = 0 : i64, scratch_operands = 0 : i64, tpu.core_type = #tpu.core_type<tc>, window_params = [{transform_indices = @transform_0, window_bounds = array<i64: 16, 32>}, {pipeline_mode = #tpu.pipeline_mode<synchronous>, transform_indices = @transform_1, window_bounds = array<i64: 32, 256>}, {pipeline_mode = #tpu.pipeline_mode<synchronous>, transform_indices = @transform_2, window_bounds = array<i64: 256, 16>}, {transform_indices = @transform_3, window_bounds = array<i64: 16, 16>}]} {
    %c0 = arith.constant 0 : index
    %c0_0 = arith.constant 0 : index
    %0 = vector.load %arg1[%c0, %c0_0] : memref<16x32xf32, #tpu.memory_space<vmem>>, vector<16x32xf32>
    %1 = arith.truncf %0 : vector<16x32xf32> to vector<16x32xbf16>
    %c0_1 = arith.constant 0 : index
    %c0_2 = arith.constant 0 : index
    %2 = vector.load %arg2[%c0_1, %c0_2] : memref<32x256xbf16, #tpu.memory_space<vmem>>, vector<32x256xbf16>
    %cst = arith.constant dense<0.000000e+00> : vector<16x256xf32>
    %3 = tpu.matmul %1, %2, %cst {dimension_numbers = #tpu.dot_dimension_numbers<[1], [0], [0], [1], [0, 0, 1, 1], [], []>} : vector<16x32xbf16>, vector<32x256xbf16>, vector<16x256xf32> -> vector<16x256xf32>
    %cst_3 = arith.constant 0.000000e+00 : f32
    %4 = vector.broadcast %cst_3 : f32 to vector<16x256xf32>
    %5 = arith.maximumf %3, %4 : vector<16x256xf32>
    %6 = arith.truncf %5 : vector<16x256xf32> to vector<16x256xbf16>
    %c0_4 = arith.constant 0 : index
    %c0_5 = arith.constant 0 : index
    %7 = vector.load %arg3[%c0_4, %c0_5] : memref<256x16xbf16, #tpu.memory_space<vmem>>, vector<256x16xbf16>
    %cst_6 = arith.constant dense<0.000000e+00> : vector<16x16xf32>
    %8 = tpu.matmul %6, %7, %cst_6 {dimension_numbers = #tpu.dot_dimension_numbers<[1], [0], [0], [1], [0, 0, 1, 1], [], []>} : vector<16x256xbf16>, vector<256x16xbf16>, vector<16x16xf32> -> vector<16x16xf32>
    %c0_7 = arith.constant 0 : index
    %c0_8 = arith.constant 0 : index
    %9 = vector.load %arg4[%c0_7, %c0_8] : memref<16x16xf32, #tpu.memory_space<vmem>>, vector<16x16xf32>
    tpu.vector_store %arg4[%c0_7, %c0_8], %8 {strides = array<i32>} : memref<16x16xf32, #tpu.memory_space<vmem>>, vector<16x16xf32>,
    return
  }
  func.func @transform_0(%arg0: i32) -> (i32, i32) {
    %c0_i32 = arith.constant 0 : i32
    %c0_i32_0 = arith.constant 0 : i32
    return %arg0, %c0_i32 : i32, i32
  }
  func.func @transform_1(%arg0: i32) -> (i32, i32) {
    %c0_i32 = arith.constant 0 : i32
    %c0_i32_0 = arith.constant 0 : i32
    %c0_i32_1 = arith.constant 0 : i32
    return %c0_i32, %c0_i32_0 : i32, i32
  }
  func.func @transform_2(%arg0: i32) -> (i32, i32) {
    %c0_i32 = arith.constant 0 : i32
    %c0_i32_0 = arith.constant 0 : i32
    %c0_i32_1 = arith.constant 0 : i32
    return %c0_i32, %c0_i32_0 : i32, i32
  }
  func.func @transform_3(%arg0: i32) -> (i32, i32) {
    %c0_i32 = arith.constant 0 : i32
    %c0_i32_0 = arith.constant 0 : i32
    return %arg0, %c0_i32 : i32, i32
  }
}

</mosaic_0001>

<llo_original>
// kernel: _mlp_forward_pallas.1
$region0: #{_mlp_forward_pallas.1}
  #allocation0 [shape = 'u32[]', space=smem, size = 0x4, offset = 0x4, fixed_abs, tag = 'smem constant byte address 0x4 - core index']
  #allocation1 [shape = 'u32[72,128]{1,0:T(1,128)}', space=vmem, size = 0x9000, scoped, tag = 'internal scratch']
  %s0 = inlined_call_operand.vmem [shape: f32[16,32], index: 0, kind: input, shape index: {}]
  %s1 = inlined_call_operand.vmem [shape: bf16[32,256], index: 1, kind: input, shape index: {}]
  %s2 = inlined_call_operand.vmem [shape: bf16[256,16], index: 2, kind: input, shape index: {}]
  %s3 = inlined_call_operand.vmem [shape: f32[16,16], index: 3, kind: output, shape index: {}]
  %s4 = sld [smem:[#allocation0]]
  $region22: #{_mlp_forward_pallas.1} parent=0
    _
  %s6 = ssub.s32 1, %s4
  %s7 = scalar_select 0, %s6, %s4
  // Predicated region
  $region2: #{_mlp_forward_pallas.1} parent=0 // pred_check
    _
  $region3: #{_mlp_forward_pallas.1} parent=0 // pred_check_branch
    %9 = sbr.rel (0) target = $region5
  $region4: #{_mlp_forward_pallas.1} parent=0 // pred_region
    _
  $region5: #{_mlp_forward_pallas.1} parent=0 // pred_fallthru
    _
  // Predicated region
  $region6: #{_mlp_forward_pallas.1} parent=0 // pred_check
    _
  $region7: #{_mlp_forward_pallas.1} parent=0 // pred_check_branch
    %11 = sbr.rel (0) target = $region9
  $region8: #{_mlp_forward_pallas.1} parent=0 // pred_region
    _
  $region9: #{_mlp_forward_pallas.1} parent=0 // pred_fallthru
    _
  // Predicated region
  $region10: #{_mlp_forward_pallas.1} parent=0 // pred_check
    _
  $region11: #{_mlp_forward_pallas.1} parent=0 // pred_check_branch
    %13 = sbr.rel (0) target = $region13
  $region12: #{_mlp_forward_pallas.1} parent=0 // pred_region
    _
  $region13: #{_mlp_forward_pallas.1} parent=0 // pred_fallthru
    _
  %v15 = vld [vmem:[%s0] sm:$0xff]
  %v16 = vld [vmem:[%s0 + $0x8] sm:$0xff]
  %v17 = vpack.c.bf16 %v16, %v15
  %v18 = vld [vmem:[%s1] sm:$0xff]
  %v19 = vld [vmem:[%s1 + $0x8] sm:$0xff]
  %v20 = vld [vmem:[%s1 + $0x10] sm:$0xff]
  %v21 = vld [vmem:[%s1 + $0x18] sm:$0xff]
  %v26 = vunpack.c.l.b16 %v18
  %v27 = vunpack.c.h.b16 %v18
  %v28 = vunpack.c.l.b16 %v19
  %v29 = vunpack.c.h.b16 %v19
  %v30 = vunpack.c.l.b16 %v20
  %v31 = vunpack.c.h.b16 %v20
  %v32 = vunpack.c.l.b16 %v21
  %v33 = vunpack.c.h.b16 %v21
  %v34 = vpack.c.b16 %v28, %v26
  %v35 = vpack.c.b16 %v29, %v27
  %v36 = vpack.c.b16 %v32, %v30
  %v37 = vpack.c.b16 %v33, %v31
  %vm42 = vcmask 261120
  %v44 = vsel %vm42, %v17, 0
  %46 = vmatpush.bf16.msra.mxu0 0
  %47 = vmatpush.bf16.msra.mxu0 0
  %48 = vmatpush.bf16.msra.mxu0 0
  %49 = vmatpush.bf16.msra.mxu0 0
  %50 = vmatpush.bf16.msra.mxu0 0
  %51 = vmatpush.bf16.msra.mxu0 0
  %52 = vmatpush.bf16.msra.mxu0 %v36
  %53 = vmatpush.bf16.msra.mxu0 %v34
  %54 = vmatmul.bf16.gmra.mxu0 %v44
  %v55 = vpop.f32.mrf.mxu0
  %v56 = vadd.f32 0.0, %v55
  %v57 = vpop.f32.mrf.mxu0
  %v58 = vadd.f32 0.0, %v57
  %59 = vdwg.mxu0
  %60 = vmatpush.bf16.msra.mxu0 0
  %61 = vmatpush.bf16.msra.mxu0 0
  %62 = vmatpush.bf16.msra.mxu0 0
  %63 = vmatpush.bf16.msra.mxu0 0
  %64 = vmatpush.bf16.msra.mxu0 0
  %65 = vmatpush.bf16.msra.mxu0 0
  %66 = vmatpush.bf16.msra.mxu0 %v37
  %67 = vmatpush.bf16.msra.mxu0 %v35
  %68 = vmatmul.bf16.gmra.mxu0 %v44
  %v69 = vpop.f32.mrf.mxu0
  %v70 = vadd.f32 0.0, %v69
  %v71 = vpop.f32.mrf.mxu0
  %v72 = vadd.f32 0.0, %v71
  %73 = vdwg.mxu0
  %v74 = vmax.f32 %v56, 0.0
  %v75 = vmax.f32 %v70, 0.0
  %v76 = vmax.f32 %v58, 0.0
  %v77 = vmax.f32 %v72, 0.0
  %v78 = vpack.c.bf16 %v76, %v74
  %v79 = vpack.c.bf16 %v77, %v75
  %v80 = vld [vmem:[%s2] sm:$0xf]
  %v81 = vld [vmem:[%s2 + $0x4] sm:$0xf]
  %v82 = vld [vmem:[%s2 + $0x8] sm:$0xf]
  %v83 = vld [vmem:[%s2 + $0xc] sm:$0xf]
  %v84 = vld [vmem:[%s2 + $0x10] sm:$0xf]
  %v85 = vld [vmem:[%s2 + $0x14] sm:$0xf]
  %v86 = vld [vmem:[%s2 + $0x18] sm:$0xf]
  %v87 = vld [vmem:[%s2 + $0x1c] sm:$0xf]
  %v88 = vld [vmem:[%s2 + $0x20] sm:$0xf]
  %v89 = vld [vmem:[%s2 + $0x24] sm:$0xf]
  %v90 = vld [vmem:[%s2 + $0x28] sm:$0xf]
  %v91 = vld [vmem:[%s2 + $0x2c] sm:$0xf]
  %v92 = vld [vmem:[%s2 + $0x30] sm:$0xf]
  %v93 = vld [vmem:[%s2 + $0x34] sm:$0xf]
  %v94 = vld [vmem:[%s2 + $0x38] sm:$0xf]
  %v95 = vld [vmem:[%s2 + $0x3c] sm:$0xf]
  %v96 = vld [vmem:[%s2 + $0x40] sm:$0xf]
  %v97 = vld [vmem:[%s2 + $0x44] sm:$0xf]
  %v98 = vld [vmem:[%s2 + $0x48] sm:$0xf]
  %v99 = vld [vmem:[%s2 + $0x4c] sm:$0xf]
  %v100 = vld [vmem:[%s2 + $0x50] sm:$0xf]
  %v101 = vld [vmem:[%s2 + $0x54] sm:$0xf]
  %v102 = vld [vmem:[%s2 + $0x58] sm:$0xf]
  %v103 = vld [vmem:[%s2 + $0x5c] sm:$0xf]
  %v104 = vld [vmem:[%s2 + $0x60] sm:$0xf]
  %v105 = vld [vmem:[%s2 + $0x64] sm:$0xf]
  %v106 = vld [vmem:[%s2 + $0x68] sm:$0xf]
  %v107 = vld [vmem:[%s2 + $0x6c] sm:$0xf]
  %v108 = vld [vmem:[%s2 + $0x70] sm:$0xf]
  %v109 = vld [vmem:[%s2 + $0x74] sm:$0xf]
  %v110 = vld [vmem:[%s2 + $0x78] sm:$0xf]
  %v111 = vld [vmem:[%s2 + $0x7c] sm:$0xf]
  %v144 = vunpack.c.l.b16 %v80
  %v145 = vunpack.c.l.b16 %v81
  %v146 = vunpack.c.l.b16 %v82
  %v147 = vunpack.c.l.b16 %v83
  %v148 = vunpack.c.l.b16 %v84
  %v149 = vunpack.c.l.b16 %v85
  %v150 = vunpack.c.l.b16 %v86
  %v151 = vunpack.c.l.b16 %v87
  %v152 = vunpack.c.l.b16 %v88
  %v153 = vunpack.c.l.b16 %v89
  %v154 = vunpack.c.l.b16 %v90
  %v155 = vunpack.c.l.b16 %v91
  %v156 = vunpack.c.l.b16 %v92
  %v157 = vunpack.c.l.b16 %v93
  %v158 = vunpack.c.l.b16 %v94
  %v159 = vunpack.c.l.b16 %v95
  %v160 = vunpack.c.l.b16 %v96
  %v161 = vunpack.c.l.b16 %v97
  %v162 = vunpack.c.l.b16 %v98
  %v163 = vunpack.c.l.b16 %v99
  %v164 = vunpack.c.l.b16 %v100
  %v165 = vunpack.c.l.b16 %v101
  %v166 = vunpack.c.l.b16 %v102
  %v167 = vunpack.c.l.b16 %v103
  %v168 = vunpack.c.l.b16 %v104
  %v169 = vunpack.c.l.b16 %v105
  %v170 = vunpack.c.l.b16 %v106
  %v171 = vunpack.c.l.b16 %v107
  %v172 = vunpack.c.l.b16 %v108
  %v173 = vunpack.c.l.b16 %v109
  %v174 = vunpack.c.l.b16 %v110
  %v175 = vunpack.c.l.b16 %v111
  %v176 = vpack.c.b16 %v145, %v144
  %v177 = vpack.c.b16 %v147, %v146
  %v178 = vpack.c.b16 %v149, %v148
  %v179 = vpack.c.b16 %v151, %v150
  %v180 = vpack.c.b16 %v153, %v152
  %v181 = vpack.c.b16 %v155, %v154
  %v182 = vpack.c.b16 %v157, %v156
  %v183 = vpack.c.b16 %v159, %v158
  %v184 = vpack.c.b16 %v161, %v160
  %v185 = vpack.c.b16 %v163, %v162
  %v186 = vpack.c.b16 %v165, %v164
  %v187 = vpack.c.b16 %v167, %v166
  %v188 = vpack.c.b16 %v169, %v168
  %v189 = vpack.c.b16 %v171, %v170
  %v190 = vpack.c.b16 %v173, %v172
  %v191 = vpack.c.b16 %v175, %v174
  %208 = vmatpush.bf16.msra.mxu0 %v183
  %209 = vmatpush.bf16.msra.mxu0 %v182
  %210 = vmatpush.bf16.msra.mxu0 %v181
  %211 = vmatpush.bf16.msra.mxu0 %v180
  %212 = vmatpush.bf16.msra.mxu0 %v179
  %213 = vmatpush.bf16.msra.mxu0 %v178
  %214 = vmatpush.bf16.msra.mxu0 %v177
  %215 = vmatpush.bf16.msra.mxu0 %v176
  %216 = vmatmul.bf16.gmra.mxu0 %v78
  %v217 = vpop.f32.mrf.mxu0
  %v218 = vadd.f32 0.0, %v217
  %v219 = vpop.f32.mrf.mxu0
  %v220 = vadd.f32 0.0, %v219
  %221 = vdwg.mxu0
  %222 = vmatpush.bf16.msra.mxu0 %v191
  %223 = vmatpush.bf16.msra.mxu0 %v190
  %224 = vmatpush.bf16.msra.mxu0 %v189
  %225 = vmatpush.bf16.msra.mxu0 %v188
  %226 = vmatpush.bf16.msra.mxu0 %v187
  %227 = vmatpush.bf16.msra.mxu0 %v186
  %228 = vmatpush.bf16.msra.mxu0 %v185
  %229 = vmatpush.bf16.msra.mxu0 %v184
  %230 = vmatmul.bf16.gmra.mxu0 %v79
  %v231 = vpop.f32.mrf.mxu0
  %v232 = vadd.f32 %v218, %v231
  %v233 = vpop.f32.mrf.mxu0
  %v234 = vadd.f32 %v220, %v233
  %235 = vdwg.mxu0
  %vm236 = vcmask 130048
  %237 = vst.msk [vmem:[%s3] sm:$0xff] %vm236, %v232
  %238 = vst.msk [vmem:[%s3 + $0x8] sm:$0xff] %vm236, %v234
  // Predicated region
  $region14: #{_mlp_forward_pallas.1} parent=0 // pred_check
    _
  $region15: #{_mlp_forward_pallas.1} parent=0 // pred_check_branch
    %240 = sbr.rel (0) target = $region17
  $region16: #{_mlp_forward_pallas.1} parent=0 // pred_region
    _
  $region17: #{_mlp_forward_pallas.1} parent=0 // pred_fallthru
    _
  // Predicated region
  $region18: #{_mlp_forward_pallas.1} parent=0 // pred_check
    _
  $region19: #{_mlp_forward_pallas.1} parent=0 // pred_check_branch
    %242 = sbr.rel (0) target = $region21
  $region20: #{_mlp_forward_pallas.1} parent=0 // pred_region
    _
  $region21: #{_mlp_forward_pallas.1} parent=0 // pred_fallthru
    _

</llo_original>
